<compile_context>
chip_gen: v7x
topology: tpu7x:2x2x1
jax: 0.10.0
libtpu: 0.0.40
codegen_flags: <defaults>
</compile_context>

<pallas_src>
import functools

import jax
import jax.numpy as jnp
from jax.experimental import pallas as pl
from jax.experimental.pallas import tpu as pltpu


# ----------------------------------------------------------------------------
# One-time probe: figure out pltpu.roll's sign convention so that
# roll(h, (sign*d) % N, axis=-1)[i] == h[(i + d) % N].
# ----------------------------------------------------------------------------
@functools.lru_cache(maxsize=None)
def _roll_shift_sign():
    def probe_kernel(x_ref, o_ref):
        o_ref[...] = pltpu.roll(x_ref[...], 1, axis=1)

    x = jnp.broadcast_to(jnp.arange(128, dtype=jnp.float32), (8, 128))
    y = pl.pallas_call(
        probe_kernel, out_shape=jax.ShapeDtypeStruct((8, 128), jnp.float32)
    )(x)
    # jnp.roll-like convention: y[0,0] == x[0,127] == 127  -> need shift = -d
    # opposite convention:      y[0,0] == x[0,1]   == 1    -> need shift = +d
    return -1 if float(y[0, 0]) > 64.0 else 1


# ----------------------------------------------------------------------------
# Fused kernel: ir_block1 + ir_block2 for one batch element, layout (C, H*W).
# ----------------------------------------------------------------------------
def _fused_ir_block_kernel(
    x_ref,                                                    # (Cin, HW)
    # ir_block1 (no SE)
    w_pw1, bn1s1, bn1b1, w_dw1, bn2s1, bn2b1, w_pwl1, bn3s1, bn3b1,
    # ir_block2 (EffectiveSE)
    w_pw2, bn1s2, bn1b2, w_dw2, bn2s2, bn2b2, w_se2, b_se2, w_pwl2, bn3s2, bn3b2,
    o_ref,                                                    # (Cout, HW)
    *, H, W, roll_shifts, has_skip1,
):
    HW = H * W

    # Boundary-validity masks for the 9 depthwise taps (shared by both blocks).
    idx = jax.lax.broadcasted_iota(jnp.int32, (1, HW), 1)
    row = idx // W
    col = idx - row * W
    masks = []
    for kidx in range(9):
        dh, dw = kidx // 3 - 1, kidx % 3 - 1
        m = None
        if dh != 0:
            m = (row + dh >= 0) & (row + dh < H)
        if dw != 0:
            v = (col + dw >= 0) & (col + dw < W)
            m = v if m is None else (m & v)
        masks.append(m)

    def dw_conv3x3(h, taps):
        # 3x3 depthwise conv, stride=1, zero pad=1, on (C, H*W) via lane rolls (XLU)
        # + masks; 3 independent accumulator chains for VALU ILP.
        accs = [None, None, None]
        for kidx in range(9):
            s = roll_shifts[kidx]
            shifted = h if s == 0 else pltpu.roll(h, s, axis=1)
            if masks[kidx] is not None:
                shifted = jnp.where(masks[kidx], shifted, 0.0)
            term = shifted * taps[:, kidx:kidx + 1]            # (C,1) tap broadcast
            j = kidx % 3
            accs[j] = term if accs[j] is None else accs[j] + term
        return accs[0] + accs[1] + accs[2]

    def inverted_residual(x, w_pw, bn1s, bn1b, w_dw, bn2s, bn2b,
                          w_pwl, bn3s, bn3b, w_se, b_se, has_skip):
        # 1x1 expansion (MXU) + BN1 + ReLU
        h = jnp.dot(w_pw[...], x, preferred_element_type=jnp.float32)
        h = jnp.maximum(h * bn1s[...] + bn1b[...], 0.0)
        # 3x3 depthwise + BN2 + ReLU
        h = dw_conv3x3(h, w_dw[...])
        h = jnp.maximum(h * bn2s[...] + bn2b[...], 0.0)
        # EffectiveSE: spatial mean -> 1x1 fc -> hard_sigmoid gate
        if w_se is not None:
            se = jnp.mean(h, axis=1, keepdims=True)            # (C, 1)
            se = jnp.dot(w_se[...], se, preferred_element_type=jnp.float32) + b_se[...]
            gate = jnp.clip(se + 3.0, 0.0, 6.0) * (1.0 / 6.0)
            h = h * gate
        # 1x1 projection (MXU) + BN3, no activation
        y = jnp.dot(w_pwl[...], h, preferred_element_type=jnp.float32)
        y = y * bn3s[...] + bn3b[...]
        if has_skip:
            y = y + x
        return y

    x = x_ref[...].astype(jnp.float32)
    h = inverted_residual(x, w_pw1, bn1s1, bn1b1, w_dw1, bn2s1, bn2b1,
                          w_pwl1, bn3s1, bn3b1, None, None, has_skip1)
    h = inverted_residual(h, w_pw2, bn1s2, bn1b2, w_dw2, bn2s2, bn2b2,
                          w_pwl2, bn3s2, bn3b2, w_se2, b_se2, True)
    o_ref[...] = h.astype(o_ref.dtype)


# ----------------------------------------------------------------------------
# IRBlock wrapper: NCHW in / NCHW out (like the PyTorch module), no transposes.
# ----------------------------------------------------------------------------
def ir_block_forward(x_nchw, params, *, in_channels, out_channels, stride=1):
    assert stride == 1, "only stride=1 implemented"
    N, Cin, H, W = x_nchw.shape
    HW = H * W
    x = x_nchw.reshape(N, Cin, HW)                 # NCHW -> (N, C, H*W): free reshape

    b1, b2 = params["block1"], params["block2"]
    weights = (
        b1["w_pw"], b1["bn1_scale"], b1["bn1_bias"], b1["w_dw"],
        b1["bn2_scale"], b1["bn2_bias"], b1["w_pwl"], b1["bn3_scale"], b1["bn3_bias"],
        b2["w_pw"], b2["bn1_scale"], b2["bn1_bias"], b2["w_dw"],
        b2["bn2_scale"], b2["bn2_bias"], b2["w_se"], b2["b_se"],
        b2["w_pwl"], b2["bn3_scale"], b2["bn3_bias"],
    )

    def full_spec(a):
        nd = a.ndim
        return pl.BlockSpec(a.shape, lambda b, _nd=nd: (0,) * _nd)

    in_specs = [pl.BlockSpec((None, Cin, HW), lambda b: (b, 0, 0))]
    in_specs += [full_spec(a) for a in weights]
    out_spec = pl.BlockSpec((None, out_channels, HW), lambda b: (b, 0, 0))

    sign = _roll_shift_sign()
    roll_shifts = tuple(
        (sign * ((k // 3 - 1) * W + (k % 3 - 1))) % HW for k in range(9))

    kernel = functools.partial(
        _fused_ir_block_kernel, H=H, W=W, roll_shifts=roll_shifts,
        has_skip1=(in_channels == out_channels and stride == 1))

    cmid1, cmid2 = in_channels, out_channels
    flops = 2 * N * HW * (in_channels * cmid1 + 9 * cmid1 + cmid1 * out_channels
                          + out_channels * cmid2 + 9 * cmid2 + cmid2 * out_channels)
    bytes_accessed = 4 * N * HW * (in_channels + out_channels) + sum(4 * w.size for w in weights)
    cost = pl.CostEstimate(flops=int(flops), transcendentals=0,
                           bytes_accessed=int(bytes_accessed))

    y = pl.pallas_call(
        kernel,
        out_shape=jax.ShapeDtypeStruct((N, out_channels, HW), x_nchw.dtype),
        grid_spec=pltpu.PrefetchScalarGridSpec(
            num_scalar_prefetch=0,
            grid=(N,),
            in_specs=in_specs,
            out_specs=out_spec,
        ),
        compiler_params=pltpu.CompilerParams(
            dimension_semantics=("parallel",),
            vmem_limit_bytes=32 * 1024 * 1024,
        ),
        cost_estimate=cost,
    )(x, *weights)
    return y.reshape(N, out_channels, H, W)


# ----------------------------------------------------------------------------
# Deterministic parameter construction (timm InvertedResidual, exp_ratio=1 => mid=in).
# Conv weights are channels-first: w_pw (Cmid,Cin), w_dw (Cmid,9), w_pwl (Cout,Cmid).
# BN folded into per-channel (scale, bias) of shape (C, 1) for inference.
# ----------------------------------------------------------------------------
def _make_bn(key, c):
    k1, k2, k3, k4 = jax.random.split(key, 4)
    gamma = jax.random.uniform(k1, (c,), jnp.float32, 0.5, 1.5)
    beta = 0.1 * jax.random.normal(k2, (c,), jnp.float32)
    mean = 0.1 * jax.random.normal(k3, (c,), jnp.float32)
    var = jax.random.uniform(k4, (c,), jnp.float32, 0.5, 1.5)
    scale = gamma / jnp.sqrt(var + 1e-5)
    bias = beta - mean * scale
    return scale.reshape(c, 1), bias.reshape(c, 1)


def make_ir_params(key, cin, cout, use_se):
    cmid = cin  # exp_ratio = 1.0
    ks = jax.random.split(key, 8)
    p = {}
    p["w_pw"] = 0.2 * jax.random.normal(ks[0], (cmid, cin), jnp.float32)
    p["bn1_scale"], p["bn1_bias"] = _make_bn(ks[1], cmid)
    p["w_dw"] = 0.2 * jax.random.normal(ks[2], (cmid, 9), jnp.float32)
    p["bn2_scale"], p["bn2_bias"] = _make_bn(ks[3], cmid)
    if use_se:
        p["w_se"] = 0.2 * jax.random.normal(ks[4], (cmid, cmid), jnp.float32)
        p["b_se"] = 0.1 * jax.random.normal(ks[5], (cmid, 1), jnp.float32)
    p["w_pwl"] = 0.2 * jax.random.normal(ks[6], (cout, cmid), jnp.float32)
    p["bn3_scale"], p["bn3_bias"] = _make_bn(ks[7], cout)
    return p


# ----------------------------------------------------------------------------
# Pure-JAX reference (NCHW) for a numerical cross-check.
# ----------------------------------------------------------------------------
def _ref_inverted_residual(x, p, use_se, has_skip):
    N, C, H, W = x.shape
    h = jnp.einsum("mc,nchw->nmhw", p["w_pw"], x)
    h = h * p["bn1_scale"].reshape(1, -1, 1, 1) + p["bn1_bias"].reshape(1, -1, 1, 1)
    h = jax.nn.relu(h)
    hp = jnp.pad(h, ((0, 0), (0, 0), (1, 1), (1, 1)))
    acc = jnp.zeros_like(h)
    for k in range(9):
        kh, kw = k // 3, k % 3
        acc = acc + hp[:, :, kh:kh + H, kw:kw + W] * p["w_dw"][:, k].reshape(1, -1, 1, 1)
    h = acc * p["bn2_scale"].reshape(1, -1, 1, 1) + p["bn2_bias"].reshape(1, -1, 1, 1)
    h = jax.nn.relu(h)
    if use_se:
        se = h.mean(axis=(2, 3))                                   # (N, C)
        se = se @ p["w_se"].T + p["b_se"].reshape(1, -1)
        gate = jnp.clip(se + 3.0, 0.0, 6.0) / 6.0
        h = h * gate[:, :, None, None]
    y = jnp.einsum("oc,nchw->nohw", p["w_pwl"], h)
    y = y * p["bn3_scale"].reshape(1, -1, 1, 1) + p["bn3_bias"].reshape(1, -1, 1, 1)
    if has_skip:
        y = y + x
    return y


def _ref_ir_block(x_nchw, params, in_channels, out_channels):
    y = _ref_inverted_residual(x_nchw, params["block1"], use_se=False,
                               has_skip=(in_channels == out_channels))
    y = _ref_inverted_residual(y, params["block2"], use_se=True, has_skip=True)
    return y


if __name__ == "__main__":
    N, CIN, COUT, H, W = 2, 8, 16, 16, 16

    key = jax.random.PRNGKey(0)
    kx, k1, k2 = jax.random.split(key, 3)
    x = jax.random.normal(kx, (N, CIN, H, W), jnp.float32)   # NCHW, like PyTorch

    params = {
        "block1": make_ir_params(k1, CIN, COUT, use_se=False),
        "block2": make_ir_params(k2, COUT, COUT, use_se=True),
    }

    out = ir_block_forward(x, params, in_channels=CIN, out_channels=COUT, stride=1)
    out = jax.block_until_ready(out)

    ref = _ref_ir_block(x, params, CIN, COUT)
    assert out.shape == (N, COUT, H, W)
    err = float(jnp.max(jnp.abs(out - ref)))
    assert jnp.allclose(out, ref, atol=1e-3, rtol=1e-3), err

    print("KERNEL_OK")
</pallas_src>

<mosaic_0001>
module attributes {stable_mosaic.version = 11 : i64} {
  func.func @probe_kernel(%arg0: memref<8x128xf32, #tpu.memory_space<vmem>>, %arg1: memref<8x128xf32, #tpu.memory_space<vmem>>) attributes {dimension_semantics = [], scalar_prefetch = 0 : i64, scratch_operands = 0 : i64, tpu.core_type = #tpu.core_type<tc>} {
    %c0 = arith.constant 0 : index
    %c0_0 = arith.constant 0 : index
    %0 = vector.load %arg0[%c0, %c0_0] : memref<8x128xf32, #tpu.memory_space<vmem>>, vector<8x128xf32>
    %c1_i32 = arith.constant 1 : i32
    %1 = tpu.dynamic_rotate %0 by %c1_i32 dim 1 : vector<8x128xf32>, i32 -> vector<8x128xf32>
    %c0_1 = arith.constant 0 : index
    %c0_2 = arith.constant 0 : index
    %2 = vector.load %arg1[%c0_1, %c0_2] : memref<8x128xf32, #tpu.memory_space<vmem>>, vector<8x128xf32>
    tpu.vector_store %arg1[%c0_1, %c0_2], %1 {strides = array<i32>} : memref<8x128xf32, #tpu.memory_space<vmem>>, vector<8x128xf32>,
    return
  }
}

</mosaic_0001>

<llo_original>
// kernel: tpu_custom_call.1
$region0: #{tpu_custom_call.1}
  #allocation0 [shape = 'u32[]', space=smem, size = 0x4, offset = 0x4, fixed_abs, tag = 'smem constant byte address 0x4 - core index']
  #allocation1 [shape = 'u32[144,128]{1,0:T(1,128)}', space=vmem, size = 0x12000, scoped, tag = 'internal scratch']
  %s0 = inlined_call_operand.hbm [shape: f32[8,128], index: 0, kind: input, shape index: {}]
  %s1 = inlined_call_operand.hbm [shape: f32[8,128], index: 1, kind: output, shape index: {}]
  %s2 = sld [smem:[#allocation0]]
  $region18: #{tpu_custom_call.1} parent=0
    _
  %s4 = ssub.s32 1, %s2
  %s5 = scalar_select 0, %s4, %s2
  $region1: #{tpu_custom_call.1} parent=0
    #allocation2 [shape = 'u8[4096]{0}', space=vmem, size = 0x1000, scoped, tag = 'input window, operand 0, single buffered']
    #allocation3 [shape = 's32[1]{0}', space=sflag, size = 0x4, scoped, tag = 'scoped memory for tpu_custom_call.1']
    #allocation4 [shape = 's32[1]{0}', space=sflag, size = 0x4, scoped, tag = 'scoped memory for tpu_custom_call.1']
    #allocation5 [shape = 'u8[4096]{0}', space=vmem, size = 0x1000, scoped, tag = 'output window, operand 0, single buffered']
    %6 = vsyncpa [#allocation3], 0
    %7 = vsyncpa [#allocation4], 0
    // Predicated region
    $region2: #{tpu_custom_call.1} parent=1 // pred_check
      _
    $region3: #{tpu_custom_call.1} parent=1 // pred_check_branch
      %9 = sbr.rel (0) target = $region5
    $region4: #{tpu_custom_call.1} parent=1 // pred_region
      %s11 = ssub.s32 128, 128
      %12 = vsyncadd [#allocation3], %s11
      %s14 = sshll.u32 [#allocation2], 4
      %s15 = int_to_ptr.vmem [resolvable:$true] %s14
      %17 = dma.hbm_to_vmem [thread:$0]  %s0, 128, %s15, [#allocation3]
    $region5: #{tpu_custom_call.1} parent=1 // pred_fallthru
      _
    // Predicated region
    $region6: #{tpu_custom_call.1} parent=1 // pred_check
      _
    $region7: #{tpu_custom_call.1} parent=1 // pred_check_branch
      %19 = sbr.rel (0) target = $region9
    $region8: #{tpu_custom_call.1} parent=1 // pred_region
      %20 = dma.done [#allocation3], 128
    $region9: #{tpu_custom_call.1} parent=1 // pred_fallthru
      _
    %v21 = vld [vmem:[#allocation2] sm:$0xff]
    %22 = vrot.lane.b32.xlu0 %v21, 1
    %v23 = vpop.permute.xlu0 %22
    %24 = vst [vmem:[#allocation5] sm:$0xff] %v23
    // Predicated region
    $region10: #{tpu_custom_call.1} parent=1 // pred_check
      _
    $region11: #{tpu_custom_call.1} parent=1 // pred_check_branch
      %26 = sbr.rel (0) target = $region13
    $region12: #{tpu_custom_call.1} parent=1 // pred_region
      %s28 = ssub.s32 128, 128
      %29 = vsyncadd [#allocation4], %s28
      %s31 = sshll.u32 [#allocation5], 4
      %s32 = int_to_ptr.vmem [resolvable:$true] %s31
      %34 = dma.vmem_to_hbm [thread:$0]  %s32, 128, %s1, [#allocation4]
    $region13: #{tpu_custom_call.1} parent=1 // pred_fallthru
      _
    // Predicated region
    $region14: #{tpu_custom_call.1} parent=1 // pred_check
      _
    $region15: #{tpu_custom_call.1} parent=1 // pred_check_branch
      %36 = sbr.rel (0) target = $region17
    $region16: #{tpu_custom_call.1} parent=1 // pred_region
      %37 = dma.done [#allocation4], 128
    $region17: #{tpu_custom_call.1} parent=1 // pred_fallthru
      _
    %38 = vsyncpa [#allocation3], 1
    %39 = vsyncpa [#allocation4], 1

</llo_original>
